<compile_context>
chip_gen: v7x
topology: tpu7x:2x2x1
jax: 0.10.0
libtpu: 0.0.40
codegen_flags: <defaults>
</compile_context>

<pallas_src>
import functools

import jax
import jax.numpy as jnp
from jax.experimental import pallas as pl
from jax.experimental.pallas import tpu as pltpu


def _flash_sdpa_kernel(q_ref, k_ref, v_ref, o_ref,
                       qs_sc, m_sc, l_sc, acc_sc, *,
                       scale, seq_len, block_kv, need_mask, probs_dtype):
    """One (bh_tile, tq) x (bh_tile, tkv) flash-attention step."""
    kv = pl.program_id(2)
    n_kv = pl.num_programs(2)

    @pl.when(kv == 0)
    def _():
        # Fold 1/sqrt(d_k) into q once per q tile (q block is revisited over
        # the whole kv axis, so doing this per step would be redundant work).
        qs_sc[...] = q_ref[...] * scale
        m_sc[...] = jnp.full(m_sc.shape, -jnp.inf, m_sc.dtype)
        l_sc[...] = jnp.zeros(l_sc.shape, l_sc.dtype)
        acc_sc[...] = jnp.zeros(acc_sc.shape, acc_sc.dtype)

    q = qs_sc[...]                  # (bh, tq, d), input dtype, pre-scaled
    k = k_ref[...]                  # (bh, tkv, d)
    v = v_ref[...]                  # (bh, tkv, d)

    # scores = q @ k^T, contracting d_k directly (batched over bh), f32 acc.
    s = jax.lax.dot_general(
        q, k,
        dimension_numbers=(((2,), (2,)), ((0,), (0,))),
        preferred_element_type=jnp.float32)          # (bh, tq, tkv)

    if need_mask:
        # Padded kv columns exist only in the final kv block: mask only there.
        def _mask_tail(sc):
            col = kv * block_kv + jax.lax.broadcasted_iota(jnp.int32, sc.shape, 2)
            return jnp.where(col < seq_len, sc, -1e30)

        s = jax.lax.cond(kv == n_kv - 1, _mask_tail, lambda sc: sc, s)

    # Online softmax update (m/l kept lane-broadcast across 128 lanes).
    m_prev = m_sc[...]                                   # (bh, tq, 128)
    l_prev = l_sc[...]                                   # (bh, tq, 128)
    s_max = jnp.max(s, axis=-1, keepdims=True)           # (bh, tq, 1)
    m_next = jnp.maximum(m_prev, s_max)                  # (bh, tq, 128)
    alpha = jnp.exp(m_prev - m_next)                     # (bh, tq, 128)

    shifted = s - m_next[..., 0:1]                       # (bh, tq, tkv)
    if probs_dtype is not None:
        shifted = shifted.astype(probs_dtype)
    p = jnp.exp(shifted)                                 # (bh, tq, tkv)

    l_sc[...] = alpha * l_prev + jnp.sum(p, axis=-1, keepdims=True,
                                         dtype=jnp.float32)
    m_sc[...] = m_next

    p_mxu = p if probs_dtype is not None else p.astype(v.dtype)
    pv = jax.lax.dot_general(
        p_mxu, v,
        dimension_numbers=(((2,), (1,)), ((0,), (0,))),
        preferred_element_type=jnp.float32)              # (bh, tq, d)
    acc_sc[...] = alpha[..., 0:1] * acc_sc[...] + pv

    @pl.when(kv == n_kv - 1)
    def _():
        # Exact reciprocal: runs once per q tile, so the EUP approx buys
        # nothing here and exact keeps parity with PyTorch softmax.
        inv_l = pl.reciprocal(l_sc[...][..., 0:1], approx=False)
        o_ref[...] = (acc_sc[...] * inv_l).astype(o_ref.dtype)


def _round_up(x, m):
    return (x + m - 1) // m * m


def _largest_divisor_leq(n, cap):
    for d in range(max(1, min(n, cap)), 0, -1):
        if n % d == 0:
            return d
    return 1


def scaled_dot_product_attention(q, k, v, *, p_dropout=0.0, d_k=None,
                                 block_q=512, block_kv=256, block_bh=8,
                                 probs_dtype=None):
    """Pallas SDPA matching ScaledDotProductAttention.forward (eval mode).

    Args:
      q, k, v: arrays of shape (B, H, K, d_k).
      p_dropout: accepted for API parity; dropout is identity in eval mode.
      d_k: key dimension used for the 1/sqrt(d_k) scale (defaults to last dim).
      block_q, block_kv: q/kv sequence tile sizes.  block_q=512 halves KV HBM
        re-streaming vs 256 (relevant on v5e/v6e long sequences); the derived
        vmem_limit keeps the footprint within v7x's budget.
      block_bh: max (batch*head) slices processed per grid step.
      probs_dtype: if set (e.g. jnp.bfloat16 on v6e/v7x), exp() and the PV
        MXU operand use this dtype; accumulation stays f32.  None = f32 exp.

    Returns:
      (B, H, K, d_k) attention output, same dtype as q.
    """
    del p_dropout  # identity in eval mode (see TODO above)
    B, H, K, D = q.shape
    if d_k is None:
        d_k = D
    scale = 1.0 / float(d_k) ** 0.5

    BH = B * H
    qf = q.reshape(BH, K, D)
    kf = k.reshape(BH, K, D)
    vf = v.reshape(BH, K, D)

    # Tile sizes: multiples of the dtype's sublane packing (8 f32, 16 bf16,
    # 32 int8/fp8), capped by the requested block size.
    itemsize = jnp.dtype(q.dtype).itemsize
    sub = max(8, 32 // itemsize)
    tq = min(block_q, _round_up(K, sub))
    tkv = min(block_kv, _round_up(K, sub))
    Kq = _round_up(K, tq)
    Kk = _round_up(K, tkv)

    # Pad only when the sequence is not tile-aligned (avoids extra HBM passes).
    if Kq > K:
        qf = jnp.pad(qf, ((0, 0), (0, Kq - K), (0, 0)))
    if Kk > K:
        kf = jnp.pad(kf, ((0, 0), (0, Kk - K), (0, 0)))
        vf = jnp.pad(vf, ((0, 0), (0, Kk - K), (0, 0)))
    need_mask = Kk > K

    bh_tile = _largest_divisor_leq(BH, block_bh)
    # v7x has 2 TensorCores: make sure some "parallel" axis has >= 2 steps.
    if BH // bh_tile == 1 and Kq // tq == 1 and BH > 1:
        bh_tile = _largest_divisor_leq(BH, BH // 2)
    grid = (BH // bh_tile, Kq // tq, Kk // tkv)

    # Scheduler hint: count the KV re-reads (one pass per q tile).
    cost = pl.CostEstimate(
        flops=4 * BH * K * K * D,            # QK^T + PV, 2 flops per MAC
        transcendentals=BH * K * K,          # exp over the score matrix
        bytes_accessed=(BH * Kq * D                      # q read
                        + 2 * (Kq // tq) * BH * Kk * D   # k, v re-reads
                        + BH * Kq * D) * itemsize,       # out write
    )

    # VMEM footprint estimate (double-buffered q/k/v/o blocks + scratch),
    # with headroom, capped at 64 MiB so a v6e config cannot blow v7x's VMEM.
    est = (2 * bh_tile * tq * D * itemsize            # q (double-buffered)
           + 2 * 2 * bh_tile * tkv * D * itemsize     # k, v (double-buffered)
           + 2 * bh_tile * tq * D * itemsize          # out (double-buffered)
           + bh_tile * tq * D * itemsize              # scaled-q scratch
           + bh_tile * tq * D * 4                     # f32 accumulator
           + 2 * bh_tile * tq * 128 * 4)              # m, l (lane-broadcast)
    vmem_limit = int(min(max(2 * est, 8 << 20), 64 << 20))

    out_padded = pl.pallas_call(
        functools.partial(_flash_sdpa_kernel, scale=scale, seq_len=K,
                          block_kv=tkv, need_mask=need_mask,
                          probs_dtype=probs_dtype),
        out_shape=jax.ShapeDtypeStruct((BH, Kq, D), q.dtype),
        grid_spec=pltpu.PrefetchScalarGridSpec(
            num_scalar_prefetch=0,
            grid=grid,
            in_specs=[
                pl.BlockSpec((bh_tile, tq, D), lambda b, i, j: (b, i, 0)),
                pl.BlockSpec((bh_tile, tkv, D), lambda b, i, j: (b, j, 0)),
                pl.BlockSpec((bh_tile, tkv, D), lambda b, i, j: (b, j, 0)),
            ],
            out_specs=pl.BlockSpec((bh_tile, tq, D), lambda b, i, j: (b, i, 0)),
            scratch_shapes=[
                pltpu.VMEM((bh_tile, tq, D), q.dtype),       # pre-scaled q
                pltpu.VMEM((bh_tile, tq, 128), jnp.float32),  # running max
                pltpu.VMEM((bh_tile, tq, 128), jnp.float32),  # running sum
                pltpu.VMEM((bh_tile, tq, D), jnp.float32),    # output accum
            ],
        ),
        compiler_params=pltpu.CompilerParams(
            dimension_semantics=("parallel", "parallel", "arbitrary"),
            vmem_limit_bytes=vmem_limit,
        ),
        cost_estimate=cost,
    )(qf, kf, vf)

    if Kq > K:
        out_padded = out_padded[:, :K, :]
    return out_padded.reshape(B, H, K, D)


def _reference_sdpa(q, k, v, d_k):
    s = jnp.einsum("bhqd,bhkd->bhqk", q, k) / (d_k ** 0.5)
    p = jax.nn.softmax(s, axis=-1)
    return jnp.einsum("bhqk,bhkd->bhqd", p, v)


if __name__ == "__main__":
    # Small shapes consistent with the module: B=2 batch, H=4 heads,
    # K=8 sequence length, d_k=32 head dimension.
    B, H, K, D = 2, 4, 8, 32
    key = jax.random.PRNGKey(0)
    key_q, key_k, key_v = jax.random.split(key, 3)
    q = jax.random.normal(key_q, (B, H, K, D), dtype=jnp.float32)
    k = jax.random.normal(key_k, (B, H, K, D), dtype=jnp.float32)
    v = jax.random.normal(key_v, (B, H, K, D), dtype=jnp.float32)

    out = scaled_dot_product_attention(q, k, v, p_dropout=0.0, d_k=D)
    out = jax.block_until_ready(out)

    ref = _reference_sdpa(q, k, v, D)
    assert out.shape == (B, H, K, D)
    max_err = float(jnp.max(jnp.abs(out - ref)))
    assert jnp.allclose(out, ref, atol=2e-3, rtol=2e-3), (
        f"mismatch vs reference (max abs err {max_err})")

    print("KERNEL_OK")
</pallas_src>

<mosaic_0001>
module attributes {stable_mosaic.version = 11 : i64} {
  func.func @_flash_sdpa_kernel(%arg0: i32, %arg1: i32, %arg2: i32, %arg3: memref<4x8x32xf32, #tpu.memory_space<vmem>>, %arg4: memref<4x8x32xf32, #tpu.memory_space<vmem>>, %arg5: memref<4x8x32xf32, #tpu.memory_space<vmem>>, %arg6: memref<4x8x32xf32, #tpu.memory_space<vmem>>, %arg7: memref<4x8x32xf32, #tpu.memory_space<vmem>>, %arg8: memref<4x8x128xf32, #tpu.memory_space<vmem>>, %arg9: memref<4x8x128xf32, #tpu.memory_space<vmem>>, %arg10: memref<4x8x32xf32, #tpu.memory_space<vmem>>) attributes {dimension_semantics = [#tpu.dimension_semantics<parallel>, #tpu.dimension_semantics<parallel>, #tpu.dimension_semantics<arbitrary>], iteration_bounds = array<i64: 2, 1, 1>, scalar_prefetch = 0 : i64, scratch_operands = 4 : i64, tpu.core_type = #tpu.core_type<tc>, window_params = [{transform_indices = @transform_0, window_bounds = array<i64: 4, 8, 32>}, {transform_indices = @transform_1, window_bounds = array<i64: 4, 8, 32>}, {transform_indices = @transform_2, window_bounds = array<i64: 4, 8, 32>}, {transform_indices = @transform_3, window_bounds = array<i64: 4, 8, 32>}]} {
    %c0_i32 = arith.constant 0 : i32
    %0 = arith.cmpi eq, %arg2, %c0_i32 : i32
    %1 = arith.extui %0 : i1 to i32
    %c0_i32_0 = arith.constant 0 : i32
    %2 = arith.cmpi ne, %1, %c0_i32_0 : i32
    scf.if %2 {
      %c0_32 = arith.constant 0 : index
      %c0_33 = arith.constant 0 : index
      %c0_34 = arith.constant 0 : index
      %36 = vector.load %arg3[%c0_32, %c0_33, %c0_34] : memref<4x8x32xf32, #tpu.memory_space<vmem>>, vector<4x8x32xf32>
      %cst_35 = arith.constant 0.176776692 : f32
      %37 = vector.broadcast %cst_35 : f32 to vector<4x8x32xf32>
      %38 = arith.mulf %36, %37 : vector<4x8x32xf32>
      %c0_36 = arith.constant 0 : index
      %c0_37 = arith.constant 0 : index
      %c0_38 = arith.constant 0 : index
      %39 = vector.load %arg7[%c0_36, %c0_37, %c0_38] : memref<4x8x32xf32, #tpu.memory_space<vmem>>, vector<4x8x32xf32>
      tpu.vector_store %arg7[%c0_36, %c0_37, %c0_38], %38 {strides = array<i32>} : memref<4x8x32xf32, #tpu.memory_space<vmem>>, vector<4x8x32xf32>,
      %cst_39 = arith.constant 0xFF800000 : f32
      %40 = vector.broadcast %cst_39 : f32 to vector<4x8x128xf32>
      %c0_40 = arith.constant 0 : index
      %c0_41 = arith.constant 0 : index
      %c0_42 = arith.constant 0 : index
      %41 = vector.load %arg8[%c0_40, %c0_41, %c0_42] : memref<4x8x128xf32, #tpu.memory_space<vmem>>, vector<4x8x128xf32>
      tpu.vector_store %arg8[%c0_40, %c0_41, %c0_42], %40 {strides = array<i32>} : memref<4x8x128xf32, #tpu.memory_space<vmem>>, vector<4x8x128xf32>,
      %cst_43 = arith.constant 0.000000e+00 : f32
      %42 = vector.broadcast %cst_43 : f32 to vector<4x8x128xf32>
      %c0_44 = arith.constant 0 : index
      %c0_45 = arith.constant 0 : index
      %c0_46 = arith.constant 0 : index
      %43 = vector.load %arg9[%c0_44, %c0_45, %c0_46] : memref<4x8x128xf32, #tpu.memory_space<vmem>>, vector<4x8x128xf32>
      tpu.vector_store %arg9[%c0_44, %c0_45, %c0_46], %42 {strides = array<i32>} : memref<4x8x128xf32, #tpu.memory_space<vmem>>, vector<4x8x128xf32>,
      %cst_47 = arith.constant 0.000000e+00 : f32
      %44 = vector.broadcast %cst_47 : f32 to vector<4x8x32xf32>
      %c0_48 = arith.constant 0 : index
      %c0_49 = arith.constant 0 : index
      %c0_50 = arith.constant 0 : index
      %45 = vector.load %arg10[%c0_48, %c0_49, %c0_50] : memref<4x8x32xf32, #tpu.memory_space<vmem>>, vector<4x8x32xf32>
      tpu.vector_store %arg10[%c0_48, %c0_49, %c0_50], %44 {strides = array<i32>} : memref<4x8x32xf32, #tpu.memory_space<vmem>>, vector<4x8x32xf32>,
    } else {
    }
    %c0 = arith.constant 0 : index
    %c0_1 = arith.constant 0 : index
    %c0_2 = arith.constant 0 : index
    %3 = vector.load %arg7[%c0, %c0_1, %c0_2] : memref<4x8x32xf32, #tpu.memory_space<vmem>>, vector<4x8x32xf32>
    %c0_3 = arith.constant 0 : index
    %c0_4 = arith.constant 0 : index
    %c0_5 = arith.constant 0 : index
    %4 = vector.load %arg4[%c0_3, %c0_4, %c0_5] : memref<4x8x32xf32, #tpu.memory_space<vmem>>, vector<4x8x32xf32>
    %c0_6 = arith.constant 0 : index
    %c0_7 = arith.constant 0 : index
    %c0_8 = arith.constant 0 : index
    %5 = vector.load %arg5[%c0_6, %c0_7, %c0_8] : memref<4x8x32xf32, #tpu.memory_space<vmem>>, vector<4x8x32xf32>
    %cst = arith.constant dense<0.000000e+00> : vector<4x8x8xf32>
    %6 = tpu.matmul %3, %4, %cst {dimension_numbers = #tpu.dot_dimension_numbers<[2], [2], [1], [1], [0, 0, 0, 1, 1, 1], [0], [0]>} : vector<4x8x32xf32>, vector<4x8x32xf32>, vector<4x8x8xf32> -> vector<4x8x8xf32>
    %c0_9 = arith.constant 0 : index
    %c0_10 = arith.constant 0 : index
    %c0_11 = arith.constant 0 : index
    %7 = vector.load %arg8[%c0_9, %c0_10, %c0_11] : memref<4x8x128xf32, #tpu.memory_space<vmem>>, vector<4x8x128xf32>
    %c0_12 = arith.constant 0 : index
    %c0_13 = arith.constant 0 : index
    %c0_14 = arith.constant 0 : index
    %8 = vector.load %arg9[%c0_12, %c0_13, %c0_14] : memref<4x8x128xf32, #tpu.memory_space<vmem>>, vector<4x8x128xf32>
    %cst_15 = arith.constant dense<0xFF800000> : vector<4x8xf32>
    %9 = vector.multi_reduction <maximumf>, %6, %cst_15 [2] : vector<4x8x8xf32> to vector<4x8xf32>
    %10 = vector.shape_cast %9 : vector<4x8xf32> to vector<4x8x1xf32>
    %11 = vector.broadcast %10 : vector<4x8x1xf32> to vector<4x8x128xf32>
    %12 = arith.maximumf %7, %11 : vector<4x8x128xf32>
    %13 = arith.subf %7, %12 : vector<4x8x128xf32>
    %14 = math.exp %13 : vector<4x8x128xf32>
    %15 = vector.extract_strided_slice %12 {offsets = [0, 0, 0], sizes = [4, 8, 1], strides = [1, 1, 1]} : vector<4x8x128xf32> to vector<4x8x1xf32>
    %16 = vector.broadcast %15 : vector<4x8x1xf32> to vector<4x8x8xf32>
    %17 = arith.subf %6, %16 : vector<4x8x8xf32>
    %18 = math.exp %17 : vector<4x8x8xf32>
    %19 = arith.mulf %14, %8 : vector<4x8x128xf32>
    %cst_16 = arith.constant dense<0.000000e+00> : vector<4x8xf32>
    %20 = vector.multi_reduction <add>, %18, %cst_16 [2] : vector<4x8x8xf32> to vector<4x8xf32>
    %21 = vector.shape_cast %20 : vector<4x8xf32> to vector<4x8x1xf32>
    %22 = vector.broadcast %21 : vector<4x8x1xf32> to vector<4x8x128xf32>
    %23 = arith.addf %19, %22 : vector<4x8x128xf32>
    %c0_17 = arith.constant 0 : index
    %c0_18 = arith.constant 0 : index
    %c0_19 = arith.constant 0 : index
    %24 = vector.load %arg9[%c0_17, %c0_18, %c0_19] : memref<4x8x128xf32, #tpu.memory_space<vmem>>, vector<4x8x128xf32>
    tpu.vector_store %arg9[%c0_17, %c0_18, %c0_19], %23 {strides = array<i32>} : memref<4x8x128xf32, #tpu.memory_space<vmem>>, vector<4x8x128xf32>,
    %c0_20 = arith.constant 0 : index
    %c0_21 = arith.constant 0 : index
    %c0_22 = arith.constant 0 : index
    %25 = vector.load %arg8[%c0_20, %c0_21, %c0_22] : memref<4x8x128xf32, #tpu.memory_space<vmem>>, vector<4x8x128xf32>
    tpu.vector_store %arg8[%c0_20, %c0_21, %c0_22], %12 {strides = array<i32>} : memref<4x8x128xf32, #tpu.memory_space<vmem>>, vector<4x8x128xf32>,
    %cst_23 = arith.constant dense<0.000000e+00> : vector<4x8x32xf32>
    %26 = tpu.matmul %18, %5, %cst_23 {dimension_numbers = #tpu.dot_dimension_numbers<[2], [1], [1], [2], [0, 0, 0, 1, 1, 2], [0], [0]>} : vector<4x8x8xf32>, vector<4x8x32xf32>, vector<4x8x32xf32> -> vector<4x8x32xf32>
    %27 = vector.extract_strided_slice %14 {offsets = [0, 0, 0], sizes = [4, 8, 1], strides = [1, 1, 1]} : vector<4x8x128xf32> to vector<4x8x1xf32>
    %c0_24 = arith.constant 0 : index
    %c0_25 = arith.constant 0 : index
    %c0_26 = arith.constant 0 : index
    %28 = vector.load %arg10[%c0_24, %c0_25, %c0_26] : memref<4x8x32xf32, #tpu.memory_space<vmem>>, vector<4x8x32xf32>
    %29 = vector.broadcast %27 : vector<4x8x1xf32> to vector<4x8x32xf32>
    %30 = arith.mulf %29, %28 : vector<4x8x32xf32>
    %31 = arith.addf %30, %26 : vector<4x8x32xf32>
    %c0_27 = arith.constant 0 : index
    %c0_28 = arith.constant 0 : index
    %c0_29 = arith.constant 0 : index
    %32 = vector.load %arg10[%c0_27, %c0_28, %c0_29] : memref<4x8x32xf32, #tpu.memory_space<vmem>>, vector<4x8x32xf32>
    tpu.vector_store %arg10[%c0_27, %c0_28, %c0_29], %31 {strides = array<i32>} : memref<4x8x32xf32, #tpu.memory_space<vmem>>, vector<4x8x32xf32>,
    %c0_i32_30 = arith.constant 0 : i32
    %33 = arith.cmpi eq, %arg2, %c0_i32_30 : i32
    %34 = arith.extui %33 : i1 to i32
    %c0_i32_31 = arith.constant 0 : i32
    %35 = arith.cmpi ne, %34, %c0_i32_31 : i32
    scf.if %35 {
      %c0_32 = arith.constant 0 : index
      %c0_33 = arith.constant 0 : index
      %c0_34 = arith.constant 0 : index
      %36 = vector.load %arg9[%c0_32, %c0_33, %c0_34] : memref<4x8x128xf32, #tpu.memory_space<vmem>>, vector<4x8x128xf32>
      %37 = vector.extract_strided_slice %36 {offsets = [0, 0, 0], sizes = [4, 8, 1], strides = [1, 1, 1]} : vector<4x8x128xf32> to vector<4x8x1xf32>
      %38 = tpu.reciprocal %37 : vector<4x8x1xf32> -> vector<4x8x1xf32>
      %c0_35 = arith.constant 0 : index
      %c0_36 = arith.constant 0 : index
      %c0_37 = arith.constant 0 : index
      %39 = vector.load %arg10[%c0_35, %c0_36, %c0_37] : memref<4x8x32xf32, #tpu.memory_space<vmem>>, vector<4x8x32xf32>
      %40 = vector.broadcast %38 : vector<4x8x1xf32> to vector<4x8x32xf32>
      %41 = arith.mulf %39, %40 : vector<4x8x32xf32>
      %c0_38 = arith.constant 0 : index
      %c0_39 = arith.constant 0 : index
      %c0_40 = arith.constant 0 : index
      %42 = vector.load %arg6[%c0_38, %c0_39, %c0_40] : memref<4x8x32xf32, #tpu.memory_space<vmem>>, vector<4x8x32xf32>
      tpu.vector_store %arg6[%c0_38, %c0_39, %c0_40], %41 {strides = array<i32>} : memref<4x8x32xf32, #tpu.memory_space<vmem>>, vector<4x8x32xf32>,
    } else {
    }
    return
  }
  func.func @transform_0(%arg0: i32, %arg1: i32, %arg2: i32) -> (i32, i32, i32) {
    %c0_i32 = arith.constant 0 : i32
    %c0_i32_0 = arith.constant 0 : i32
    return %arg0, %arg1, %c0_i32 : i32, i32, i32
  }
  func.func @transform_1(%arg0: i32, %arg1: i32, %arg2: i32) -> (i32, i32, i32) {
    %c0_i32 = arith.constant 0 : i32
    %c0_i32_0 = arith.constant 0 : i32
    return %arg0, %arg2, %c0_i32 : i32, i32, i32
  }
  func.func @transform_2(%arg0: i32, %arg1: i32, %arg2: i32) -> (i32, i32, i32) {
    %c0_i32 = arith.constant 0 : i32
    %c0_i32_0 = arith.constant 0 : i32
    return %arg0, %arg2, %c0_i32 : i32, i32, i32
  }
  func.func @transform_3(%arg0: i32, %arg1: i32, %arg2: i32) -> (i32, i32, i32) {
    %c0_i32 = arith.constant 0 : i32
    %c0_i32_0 = arith.constant 0 : i32
    return %arg0, %arg1, %c0_i32 : i32, i32, i32
  }
}

</mosaic_0001>

<llo_original>
// kernel: tpu_custom_call.1
$region0: #{tpu_custom_call.1}
  #allocation0 [shape = 'u32[]', space=smem, size = 0x4, offset = 0x4, fixed_abs, tag = 'smem constant byte address 0x4 - core index']
  #allocation1 [shape = 'u32[144,128]{1,0:T(1,128)}', space=vmem, size = 0x12000, scoped, tag = 'internal scratch']
  #allocation2 [shape = 'f32[4,8,32]{2,1,0:T(8,128)}', space=vmem, size = 0x4000, scoped, tag = 'scratch operand']
  #allocation3 [shape = 'f32[4,8,128]{2,1,0:T(8,128)}', space=vmem, size = 0x4000, scoped, tag = 'scratch operand']
  #allocation4 [shape = 'f32[4,8,128]{2,1,0:T(8,128)}', space=vmem, size = 0x4000, scoped, tag = 'scratch operand']
  #allocation5 [shape = 'f32[4,8,32]{2,1,0:T(8,128)}', space=vmem, size = 0x4000, scoped, tag = 'scratch operand']
  %s0 = inlined_call_operand.hbm [shape: f32[8,8,32], index: 0, kind: input, shape index: {}]
  %s1 = inlined_call_operand.hbm [shape: f32[8,8,32], index: 1, kind: input, shape index: {}]
  %s2 = inlined_call_operand.hbm [shape: f32[8,8,32], index: 2, kind: input, shape index: {}]
  %s3 = inlined_call_operand.hbm [shape: f32[8,8,32], index: 3, kind: output, shape index: {}]
  %s4 = sld [smem:[#allocation0]]
  $region65: #{tpu_custom_call.1} parent=0
    _
  %s6 = ssub.s32 1, %s4
  %s7 = scalar_select 0, %s6, %s4
  $region1: #{tpu_custom_call.1} parent=0
    #allocation6 [shape = 'u8[32768]{0}', space=vmem, size = 0x8000, scoped, tag = 'input window, operand 0']
    #allocation7 [shape = 's32[2]{0}', space=sflag, size = 0x8, scoped, tag = 'scoped memory for tpu_custom_call.1']
    #allocation8 [shape = 's32[2]{0}', space=sflag, size = 0x8, scoped, tag = 'scoped memory for tpu_custom_call.1']
    #allocation9 [shape = 'u8[32768]{0}', space=vmem, size = 0x8000, scoped, tag = 'input window, operand 1']
    #allocation10 [shape = 's32[2]{0}', space=sflag, size = 0x8, scoped, tag = 'scoped memory for tpu_custom_call.1']
    #allocation11 [shape = 'u8[32768]{0}', space=vmem, size = 0x8000, scoped, tag = 'input window, operand 2']
    #allocation12 [shape = 'u8[32768]{0}', space=vmem, size = 0x8000, scoped, tag = 'output window, operand 0']
    %8 = vsyncpa [#allocation7], 0
    %s9 = scalar_lea.sflag [#allocation7], 1
    %10 = vsyncpa %s9, 0
    %11 = vsyncpa [#allocation10], 0
    %s12 = scalar_lea.sflag [#allocation10], 1
    %13 = vsyncpa %s12, 0
    %14 = vsyncpa [#allocation8], 0
    %s15 = scalar_lea.sflag [#allocation8], 1
    %16 = vsyncpa %s15, 0
    loop: start=0, step=1, limit=4
    $region2: #{tpu_custom_call.1} parent=1 // loop_pre_header
      _
    $region3: #{tpu_custom_call.1} parent=1 // loop_header
      %s18 = sphi 0, %s22
      %p19 = scmp.ge.s32.totalorder %s18, 4
      %s25 = sphi 0, %s44
      %s26 = sphi 0, %s40
      %s27 = sphi 0, %s36
      %s28 = sphi 0, %s25
      %s29 = sphi 0, %s26
      %s30 = sphi 0, %s27
      %s31 = sphi 0, %s28
      %s32 = sphi 0, %s29
      %s33 = sphi 0, %s30
      %s49 = sphi 0, %s51
      %s52 = sphi 0, %s49
      %s53 = sphi 0, %s52
      %s69 = sphi 0, %s53
      %s77 = sphi 0, %s79
      %s80 = sphi 0, %s77
      %s81 = sphi 0, %s80
      %s97 = sphi 0, %s81
      %s105 = sphi 0, %s107
      %s108 = sphi 0, %s105
      %s109 = sphi 0, %s108
      %s125 = sphi 0, %s109
      %s133 = sphi 0, %s135
      %s136 = sphi 0, %s133
      %s137 = sphi 0, %s136
      %s153 = sphi 0, %s137
    $region4: #{tpu_custom_call.1} parent=1 // loop_header_branch
      %21 = sbr.rel (%p19) target = $region8
    $region5: #{tpu_custom_call.1} parent=1 // loop_body
      %s23 = ssub.s32 %s18, 1
      %s24 = ssub.s32 %s18, 2
      %s34 = sadd.s32 1, %s27
      %p35 = scmp.ge.s32.totalorder %s34, 1
      %s36 = scalar_select %p35, 0, %s34
      %s37 = sadd.s32 1, %s26
      %s38 = scalar_select %p35, %s37, %s26
      %p39 = scmp.ge.s32.totalorder %s38, 1
      %s40 = scalar_select %p39, 0, %s38
      %s41 = sadd.s32 1, %s25
      %s42 = scalar_select %p39, %s41, %s25
      %p43 = scmp.ge.s32.totalorder %s42, 2
      %s44 = scalar_select %p43, 0, %s42
      %s45 = ssub.s32 %s25, %s44
      %s46 = ssub.s32 %s26, %s40
      %s47 = sor.u32 %s45, %s46
      %p48 = scmp.eq.s32.totalorder %s47, 0
      %s50 = sadd.s32 %s49, 1
      %s51 = scalar_select %p48, %s49, %s50
      %p54 = pneg %p48
      %p55 = scmp.eq.s32.totalorder %s18, 1
      %p56 = por %p54, %p55
      %p57 = scmp.ne.s32.totalorder %s49, %s52
      %p58 = scmp.eq.s32.totalorder %s18, 0
      %p59 = por %p57, %p58
      %p60 = scmp.ne.s32.totalorder %s49, %s52
      %p61 = scmp.eq.s32.totalorder %s23, 1
      %p62 = por %p60, %p61
      %p63 = scmp.ne.s32.totalorder %s52, %s53
      %p64 = scmp.eq.s32.totalorder %s23, 0
      %p65 = por %p63, %p64
      %p66 = scmp.ne.s32.totalorder %s52, %s53
      %p67 = scmp.eq.s32.totalorder %s24, 1
      %p68 = por %p66, %p67
      %p70 = scmp.ne.s32.totalorder %s53, %s69
      %p71 = scmp.eq.s32.totalorder %s24, 0
      %p72 = por %p70, %p71
      %s73 = ssub.s32 %s25, %s44
      %s74 = ssub.s32 %s27, %s36
      %s75 = sor.u32 %s73, %s74
      %p76 = scmp.eq.s32.totalorder %s75, 0
      %s78 = sadd.s32 %s77, 1
      %s79 = scalar_select %p76, %s77, %s78
      %p82 = pneg %p76
      %p83 = scmp.eq.s32.totalorder %s18, 1
      %p84 = por %p82, %p83
      %p85 = scmp.ne.s32.totalorder %s77, %s80
      %p86 = scmp.eq.s32.totalorder %s18, 0
      %p87 = por %p85, %p86
      %p88 = scmp.ne.s32.totalorder %s77, %s80
      %p89 = scmp.eq.s32.totalorder %s23, 1
      %p90 = por %p88, %p89
      %p91 = scmp.ne.s32.totalorder %s80, %s81
      %p92 = scmp.eq.s32.totalorder %s23, 0
      %p93 = por %p91, %p92
      %p94 = scmp.ne.s32.totalorder %s80, %s81
      %p95 = scmp.eq.s32.totalorder %s24, 1
      %p96 = por %p94, %p95
      %p98 = scmp.ne.s32.totalorder %s81, %s97
      %p99 = scmp.eq.s32.totalorder %s24, 0
      %p100 = por %p98, %p99
      %s101 = ssub.s32 %s25, %s44
      %s102 = ssub.s32 %s27, %s36
      %s103 = sor.u32 %s101, %s102
      %p104 = scmp.eq.s32.totalorder %s103, 0
      %s106 = sadd.s32 %s105, 1
      %s107 = scalar_select %p104, %s105, %s106
      %p110 = pneg %p104
      %p111 = scmp.eq.s32.totalorder %s18, 1
      %p112 = por %p110, %p111
      %p113 = scmp.ne.s32.totalorder %s105, %s108
      %p114 = scmp.eq.s32.totalorder %s18, 0
      %p115 = por %p113, %p114
      %p116 = scmp.ne.s32.totalorder %s105, %s108
      %p117 = scmp.eq.s32.totalorder %s23, 1
      %p118 = por %p116, %p117
      %p119 = scmp.ne.s32.totalorder %s108, %s109
      %p120 = scmp.eq.s32.totalorder %s23, 0
      %p121 = por %p119, %p120
      %p122 = scmp.ne.s32.totalorder %s108, %s109
      %p123 = scmp.eq.s32.totalorder %s24, 1
      %p124 = por %p122, %p123
      %p126 = scmp.ne.s32.totalorder %s109, %s125
      %p127 = scmp.eq.s32.totalorder %s24, 0
      %p128 = por %p126, %p127
      %s129 = ssub.s32 %s25, %s44
      %s130 = ssub.s32 %s26, %s40
      %s131 = sor.u32 %s129, %s130
      %p132 = scmp.eq.s32.totalorder %s131, 0
      %s134 = sadd.s32 %s133, 1
      %s135 = scalar_select %p132, %s133, %s134
      %p138 = pneg %p132
      %p139 = scmp.eq.s32.totalorder %s18, 1
      %p140 = por %p138, %p139
      %p141 = scmp.ne.s32.totalorder %s133, %s136
      %p142 = scmp.eq.s32.totalorder %s18, 0
      %p143 = por %p141, %p142
      %p144 = scmp.ne.s32.totalorder %s133, %s136
      %p145 = scmp.eq.s32.totalorder %s23, 1
      %p146 = por %p144, %p145
      %p147 = scmp.ne.s32.totalorder %s136, %s137
      %p148 = scmp.eq.s32.totalorder %s23, 0
      %p149 = por %p147, %p148
      %p150 = scmp.ne.s32.totalorder %s136, %s137
      %p151 = scmp.eq.s32.totalorder %s24, 1
      %p152 = por %p150, %p151
      %p154 = scmp.ne.s32.totalorder %s137, %s153
      %p155 = scmp.eq.s32.totalorder %s24, 0
      %p156 = por %p154, %p155
      %p157 = scmp.le.s32.totalorder 1, %s18
      %p158 = scmp.lt.s32.totalorder %s18, 3
      %p159 = pnand %p157, %p158
      %p160 = pneg %p159
      // Predicated region
      $region9: #{tpu_custom_call.1} parent=5 // pred_check
        _
      $region10: #{tpu_custom_call.1} parent=5 // pred_check_branch
        %162 = sbr.rel (%p159) target = $region12
      $region11: #{tpu_custom_call.1} parent=5 // pred_region
        %s163 = ssub.s32 %s18, 1
      $region12: #{tpu_custom_call.1} parent=5 // pred_fallthru
        _
      %p164 = scmp.lt.s32.totalorder %s18, 2
      // Predicated region
      $region13: #{tpu_custom_call.1} parent=5 // pred_check
        %p165 = pneg %p164
      $region14: #{tpu_custom_call.1} parent=5 // pred_check_branch
        %167 = sbr.rel (%p165) target = $region16
      $region15: #{tpu_custom_call.1} parent=5 // pred_region
        // Predicated region
        $region17: #{tpu_custom_call.1} parent=15 // pred_check
          %p168 = pneg %p59
        $region18: #{tpu_custom_call.1} parent=15 // pred_check_branch
          %170 = sbr.rel (%p168) target = $region20
        $region19: #{tpu_custom_call.1} parent=15 // pred_region
          %s171 = sand.u32 %s49, 1
          %s172 = scalar_lea.sflag [#allocation7], %s171
          %s173 = sand.u32 %s49, 1
          %s174 = smul.addr %s173, 32
          %s175 = scalar_lea.vmem [#allocation6], %s174
          %s176 = smul.u32 4, %s25
          %s178 = ssub.s32 512, 512
          %179 = vsyncadd %s172, %s178
          %s180 = sadd.s32 %s26, %s176
          %s181 = smul.addr %s180, 128
          %s182 = scalar_lea.hbm %s0, %s181
          %s183 = sshll.u32 %s175, 4
          %s184 = int_to_ptr.vmem [resolvable:$true] %s183
          %189 = dma.hbm_to_vmem [thread:$0]  %s182, 512, %s184, %s172, 128, 128, 8
        $region20: #{tpu_custom_call.1} parent=15 // pred_fallthru
          _
        // Predicated region
        $region21: #{tpu_custom_call.1} parent=15 // pred_check
          %p190 = pneg %p87
        $region22: #{tpu_custom_call.1} parent=15 // pred_check_branch
          %192 = sbr.rel (%p190) target = $region24
        $region23: #{tpu_custom_call.1} parent=15 // pred_region
          %s193 = sand.u32 %s18, 1
          %s194 = scalar_lea.sflag [#allocation10], %s193
          %s195 = sand.u32 %s77, 1
          %s196 = smul.addr %s195, 32
          %s197 = scalar_lea.vmem [#allocation9], %s196
          %s198 = smul.u32 4, %s25
          %s200 = ssub.s32 512, 512
          %201 = vsyncadd %s194, %s200
          %s202 = sadd.s32 %s27, %s198
          %s203 = smul.addr %s202, 128
          %s204 = scalar_lea.hbm %s1, %s203
          %s205 = sshll.u32 %s197, 4
          %s206 = int_to_ptr.vmem [resolvable:$true] %s205
          %211 = dma.hbm_to_vmem [thread:$0]  %s204, 512, %s206, %s194, 128, 128, 8
        $region24: #{tpu_custom_call.1} parent=15 // pred_fallthru
          _
        // Predicated region
        $region25: #{tpu_custom_call.1} parent=15 // pred_check
          %p212 = pneg %p115
        $region26: #{tpu_custom_call.1} parent=15 // pred_check_branch
          %214 = sbr.rel (%p212) target = $region28
        $region27: #{tpu_custom_call.1} parent=15 // pred_region
          %s215 = sand.u32 %s18, 1
          %s216 = scalar_lea.sflag [#allocation10], %s215
          %s217 = sand.u32 %s105, 1
          %s218 = smul.addr %s217, 32
          %s219 = scalar_lea.vmem [#allocation11], %s218
          %s220 = smul.u32 4, %s25
          %s222 = ssub.s32 512, 512
          %223 = vsyncadd %s216, %s222
          %s224 = sadd.s32 %s27, %s220
          %s225 = smul.addr %s224, 128
          %s226 = scalar_lea.hbm %s2, %s225
          %s227 = sshll.u32 %s219, 4
          %s228 = int_to_ptr.vmem [resolvable:$true] %s227
          %233 = dma.hbm_to_vmem [thread:$0]  %s226, 512, %s228, %s216, 128, 128, 8
        $region28: #{tpu_custom_call.1} parent=15 // pred_fallthru
          _
      $region16: #{tpu_custom_call.1} parent=5 // pred_fallthru
        _
      %p234 = scmp.le.s32.totalorder 1, %s18
      %p235 = scmp.lt.s32.totalorder %s18, 3
      %p236 = pnand %p234, %p235
      %p237 = pneg %p236
      // Predicated region
      $region29: #{tpu_custom_call.1} parent=5 // pred_check
        _
      $region30: #{tpu_custom_call.1} parent=5 // pred_check_branch
        %239 = sbr.rel (%p236) target = $region32
      $region31: #{tpu_custom_call.1} parent=5 // pred_region
        %s240 = ssub.s32 %s18, 1
        %s241 = sand.u32 %s52, 1
        %s242 = scalar_lea.sflag [#allocation7], %s241
        %s243 = sand.u32 %s52, 1
        %s244 = smul.addr %s243, 32
        %s245 = scalar_lea.vmem [#allocation6], %s244
        // Predicated region
        $region33: #{tpu_custom_call.1} parent=31 // pred_check
          %p246 = pneg %p65
        $region34: #{tpu_custom_call.1} parent=31 // pred_check_branch
          %248 = sbr.rel (%p246) target = $region36
        $region35: #{tpu_custom_call.1} parent=31 // pred_region
          %249 = dma.done %s242, 512
        $region36: #{tpu_custom_call.1} parent=31 // pred_fallthru
          _
        %s250 = sand.u32 %s23, 1
        %s251 = scalar_lea.sflag [#allocation10], %s250
        %s252 = sand.u32 %s80, 1
        %s253 = smul.addr %s252, 32
        %s254 = scalar_lea.vmem [#allocation9], %s253
        // Predicated region
        $region37: #{tpu_custom_call.1} parent=31 // pred_check
          %p255 = pneg %p93
        $region38: #{tpu_custom_call.1} parent=31 // pred_check_branch
          %257 = sbr.rel (%p255) target = $region40
        $region39: #{tpu_custom_call.1} parent=31 // pred_region
          %258 = dma.done %s251, 512
        $region40: #{tpu_custom_call.1} parent=31 // pred_fallthru
          _
        %s259 = sand.u32 %s23, 1
        %s260 = scalar_lea.sflag [#allocation10], %s259
        %s261 = sand.u32 %s108, 1
        %s262 = smul.addr %s261, 32
        %s263 = scalar_lea.vmem [#allocation11], %s262
        // Predicated region
        $region41: #{tpu_custom_call.1} parent=31 // pred_check
          %p264 = pneg %p121
        $region42: #{tpu_custom_call.1} parent=31 // pred_check_branch
          %266 = sbr.rel (%p264) target = $region44
        $region43: #{tpu_custom_call.1} parent=31 // pred_region
          %267 = dma.done %s260, 512
        $region44: #{tpu_custom_call.1} parent=31 // pred_fallthru
          _
        %s268 = sand.u32 %s52, 1
        %s269 = scalar_lea.sflag [#allocation7], %s268
        %s270 = sand.u32 %s52, 1
        %s271 = smul.addr %s270, 32
        %s272 = scalar_lea.vmem [#allocation6], %s271
        %p273 = pneg %p65
        %p274 = pneg %p62
        %s275 = sand.u32 %s23, 1
        %s276 = scalar_lea.sflag [#allocation10], %s275
        %s277 = sand.u32 %s80, 1
        %s278 = smul.addr %s277, 32
        %s279 = scalar_lea.vmem [#allocation9], %s278
        %p280 = pneg %p93
        %p281 = pneg %p90
        %s282 = sand.u32 %s23, 1
        %s283 = scalar_lea.sflag [#allocation10], %s282
        %s284 = sand.u32 %s108, 1
        %s285 = smul.addr %s284, 32
        %s286 = scalar_lea.vmem [#allocation11], %s285
        %p287 = pneg %p121
        %p288 = pneg %p118
        %p289 = pneg %p149
        %p290 = pneg %p146
        %s291 = sand.u32 %s136, 1
        %s292 = scalar_lea.sflag [#allocation8], %s291
        %s293 = sand.u32 %s136, 1
        %s294 = smul.addr %s293, 32
        %s295 = scalar_lea.vmem [#allocation12], %s294
        %s296 = smul.u32 4, %s28
        %s297 = smul.u32 4, %s28
        %s298 = smul.u32 4, %s28
        %s299 = smul.u32 4, %s28
        %p300 = scmp.eq.s32.totalorder %s30, 0
        // Predicated region
        $region45: #{tpu_custom_call.1} parent=31 // pred_check
          %p301 = pneg %p300
        $region46: #{tpu_custom_call.1} parent=31 // pred_check_branch
          %303 = sbr.rel (%p301) target = $region48
        $region47: #{tpu_custom_call.1} parent=31 // pred_region
          %v304 = vld [vmem:[%s245] sm:$0xff]
          %v305 = vld [vmem:[%s245 + $0x8] sm:$0xff]
          %v306 = vld [vmem:[%s245 + $0x10] sm:$0xff]
          %v307 = vld [vmem:[%s245 + $0x18] sm:$0xff]
          %v308 = vmul.f32 %v304, 0.17677669
          %v309 = vmul.f32 %v305, 0.17677669
          %v310 = vmul.f32 %v306, 0.17677669
          %v311 = vmul.f32 %v307, 0.17677669
          %vm312 = vcmask 261120
          %313 = vst.msk [vmem:[#allocation2] sm:$0xff] %vm312, %v308
          %314 = vst.msk [vmem:[#allocation2 + $0x8] sm:$0xff] %vm312, %v309
          %315 = vst.msk [vmem:[#allocation2 + $0x10] sm:$0xff] %vm312, %v310
          %316 = vst.msk [vmem:[#allocation2 + $0x18] sm:$0xff] %vm312, %v311
          %317 = vst [vmem:[#allocation3] sm:$0xff] -inf
          %318 = vst [vmem:[#allocation3 + $0x8] sm:$0xff] -inf
          %319 = vst [vmem:[#allocation3 + $0x10] sm:$0xff] -inf
          %320 = vst [vmem:[#allocation3 + $0x18] sm:$0xff] -inf
          %321 = vst [vmem:[#allocation4] sm:$0xff] 0.0
          %322 = vst [vmem:[#allocation4 + $0x8] sm:$0xff] 0.0
          %323 = vst [vmem:[#allocation4 + $0x10] sm:$0xff] 0.0
          %324 = vst [vmem:[#allocation4 + $0x18] sm:$0xff] 0.0
          %325 = vst.msk [vmem:[#allocation5] sm:$0xff] %vm312, 0.0
          %326 = vst.msk [vmem:[#allocation5 + $0x8] sm:$0xff] %vm312, 0.0
          %327 = vst.msk [vmem:[#allocation5 + $0x10] sm:$0xff] %vm312, 0.0
          %328 = vst.msk [vmem:[#allocation5 + $0x18] sm:$0xff] %vm312, 0.0
        $region48: #{tpu_custom_call.1} parent=31 // pred_fallthru
          _
        %v329 = vld [vmem:[#allocation2] sm:$0xff]
        %v330 = vld [vmem:[#allocation2 + $0x8] sm:$0xff]
        %v331 = vld [vmem:[#allocation2 + $0x10] sm:$0xff]
        %v332 = vld [vmem:[#allocation2 + $0x18] sm:$0xff]
        %v333 = vld [vmem:[%s254] sm:$0xff]
        %v334 = vld [vmem:[%s254 + $0x8] sm:$0xff]
        %v335 = vld [vmem:[%s254 + $0x10] sm:$0xff]
        %v336 = vld [vmem:[%s254 + $0x18] sm:$0xff]
        %v337 = vld [vmem:[%s263] sm:$0xff]
        %v338 = vld [vmem:[%s263 + $0x8] sm:$0xff]
        %v339 = vld [vmem:[%s263 + $0x10] sm:$0xff]
        %v340 = vld [vmem:[%s263 + $0x18] sm:$0xff]
        %vm341 = vcmask 261120
        %v343 = vsel %vm341, %v329, 0
        %v346 = vsel %vm341, %v333, 0
        %348 = vmatprep.subr.mxu0 0.0
        %349 = vmatpush1.xpose.msra.mxu0 %v346
        %350 = vmatprep.subr.mxu0 0.0
        %351 = vmatpush1.xpose.msra.mxu0 0.0
        %352 = vmatprep.subr.mxu0 0.0
        %353 = vmatpush1.xpose.msra.mxu0 0.0
        %354 = vmatprep.subr.mxu0 0.0
        %355 = vmatpush1.xpose.msra.mxu0 0.0
        %356 = vmatprep.subr.mxu0 0.0
        %357 = vmatpush1.xpose.msra.mxu0 0.0
        %358 = vmatprep.subr.mxu0 0.0
        %359 = vmatpush1.xpose.msra.mxu0 0.0
        %360 = vmatprep.subr.mxu0 0.0
        %361 = vmatpush1.xpose.msra.mxu0 0.0
        %362 = vmatprep.subr.mxu0 0.0
        %363 = vmatpush1.xpose.msra.mxu0 0.0
        %364 = vmatprep.subr.mxu0 0.0
        %365 = vmatpush1.xpose.msra.mxu0 0.0
        %366 = vmatprep.subr.mxu0 0.0
        %367 = vmatpush1.xpose.msra.mxu0 0.0
        %368 = vmatprep.subr.mxu0 0.0
        %369 = vmatpush1.xpose.msra.mxu0 0.0
        %370 = vmatprep.subr.mxu0 0.0
        %371 = vmatpush1.xpose.msra.mxu0 0.0
        %372 = vmatprep.subr.mxu0 0.0
        %373 = vmatpush1.xpose.msra.mxu0 0.0
        %374 = vmatprep.subr.mxu0 0.0
        %375 = vmatpush1.xpose.msra.mxu0 0.0
        %376 = vmatprep.subr.mxu0 0.0
        %377 = vmatpush1.xpose.msra.mxu0 0.0
        %378 = vmatprep.subr.mxu0 0.0
        %379 = vmatpush1.xpose.msra.mxu0 0.0
        %380 = vmatprep.subr.mxu0 0.0
        %381 = vmatpush1.xpose.msra.mxu0 0.0
        %382 = vmatprep.subr.mxu0 0.0
        %383 = vmatpush1.xpose.msra.mxu0 0.0
        %384 = vmatprep.subr.mxu0 0.0
        %385 = vmatpush1.xpose.msra.mxu0 0.0
        %386 = vmatprep.subr.mxu0 0.0
        %387 = vmatpush1.xpose.msra.mxu0 0.0
        %388 = vmatprep.subr.mxu0 0.0
        %389 = vmatpush1.xpose.msra.mxu0 0.0
        %390 = vmatprep.subr.mxu0 0.0
        %391 = vmatpush1.xpose.msra.mxu0 0.0
        %392 = vmatprep.subr.mxu0 0.0
        %393 = vmatpush1.xpose.msra.mxu0 0.0
        %394 = vmatprep.subr.mxu0 0.0
        %395 = vmatpush1.xpose.msra.mxu0 0.0
        %396 = vmatprep.subr.mxu0 0.0
        %397 = vmatpush1.xpose.msra.mxu0 0.0
        %398 = vmatprep.subr.mxu0 0.0
        %399 = vmatpush1.xpose.msra.mxu0 0.0
        %400 = vmatprep.subr.mxu0 0.0
        %401 = vmatpush1.xpose.msra.mxu0 0.0
        %402 = vmatprep.subr.mxu0 0.0
        %403 = vmatpush1.xpose.msra.mxu0 0.0
        %404 = vmatprep.subr.mxu0 0.0
        %405 = vmatpush1.xpose.msra.mxu0 0.0
        %406 = vmatprep.subr.mxu0 0.0
        %407 = vmatpush1.xpose.msra.mxu0 0.0
        %408 = vmatprep.subr.mxu0 0.0
        %409 = vmatpush1.xpose.msra.mxu0 0.0
        %410 = vmatprep.subr.mxu0 0.0
        %411 = vmatpush1.xpose.msra.mxu0 0.0
        %412 = vmatprep.mubr.f32.mxu0 0.0
        %413 = vmatmul.mubr.f32.gmra.mrb[0].mxu0 %v343
        %v414 = vpop.f32.mrb[0].mxu0
        %v415 = vadd.f32 0.0, %v414
        %v416 = vpop.f32.mrb[0].mxu0
        %417 = vdwg.mxu0
        %v419 = vsel %vm341, %v330, 0
        %v422 = vsel %vm341, %v334, 0
        %424 = vmatprep.subr.mxu0 0.0
        %425 = vmatpush1.xpose.msra.mxu0 %v422
        %426 = vmatprep.subr.mxu0 0.0
        %427 = vmatpush1.xpose.msra.mxu0 0.0
        %428 = vmatprep.subr.mxu0 0.0
        %429 = vmatpush1.xpose.msra.mxu0 0.0
        %430 = vmatprep.subr.mxu0 0.0
        %431 = vmatpush1.xpose.msra.mxu0 0.0
        %432 = vmatprep.subr.mxu0 0.0
        %433 = vmatpush1.xpose.msra.mxu0 0.0
        %434 = vmatprep.subr.mxu0 0.0
        %435 = vmatpush1.xpose.msra.mxu0 0.0
        %436 = vmatprep.subr.mxu0 0.0
        %437 = vmatpush1.xpose.msra.mxu0 0.0
        %438 = vmatprep.subr.mxu0 0.0
        %439 = vmatpush1.xpose.msra.mxu0 0.0
        %440 = vmatprep.subr.mxu0 0.0
        %441 = vmatpush1.xpose.msra.mxu0 0.0
        %442 = vmatprep.subr.mxu0 0.0
        %443 = vmatpush1.xpose.msra.mxu0 0.0
        %444 = vmatprep.subr.mxu0 0.0
        %445 = vmatpush1.xpose.msra.mxu0 0.0
        %446 = vmatprep.subr.mxu0 0.0
        %447 = vmatpush1.xpose.msra.mxu0 0.0
        %448 = vmatprep.subr.mxu0 0.0
        %449 = vmatpush1.xpose.msra.mxu0 0.0
        %450 = vmatprep.subr.mxu0 0.0
        %451 = vmatpush1.xpose.msra.mxu0 0.0
        %452 = vmatprep.subr.mxu0 0.0
        %453 = vmatpush1.xpose.msra.mxu0 0.0
        %454 = vmatprep.subr.mxu0 0.0
        %455 = vmatpush1.xpose.msra.mxu0 0.0
        %456 = vmatprep.subr.mxu0 0.0
        %457 = vmatpush1.xpose.msra.mxu0 0.0
        %458 = vmatprep.subr.mxu0 0.0
        %459 = vmatpush1.xpose.msra.mxu0 0.0
        %460 = vmatprep.subr.mxu0 0.0
        %461 = vmatpush1.xpose.msra.mxu0 0.0
        %462 = vmatprep.subr.mxu0 0.0
        %463 = vmatpush1.xpose.msra.mxu0 0.0
        %464 = vmatprep.subr.mxu0 0.0
        %465 = vmatpush1.xpose.msra.mxu0 0.0
        %466 = vmatprep.subr.mxu0 0.0
        %467 = vmatpush1.xpose.msra.mxu0 0.0
        %468 = vmatprep.subr.mxu0 0.0
        %469 = vmatpush1.xpose.msra.mxu0 0.0
        %470 = vmatprep.subr.mxu0 0.0
        %471 = vmatpush1.xpose.msra.mxu0 0.0
        %472 = vmatprep.subr.mxu0 0.0
        %473 = vmatpush1.xpose.msra.mxu0 0.0
        %474 = vmatprep.subr.mxu0 0.0
        %475 = vmatpush1.xpose.msra.mxu0 0.0
        %476 = vmatprep.subr.mxu0 0.0
        %477 = vmatpush1.xpose.msra.mxu0 0.0
        %478 = vmatprep.subr.mxu0 0.0
        %479 = vmatpush1.xpose.msra.mxu0 0.0
        %480 = vmatprep.subr.mxu0 0.0
        %481 = vmatpush1.xpose.msra.mxu0 0.0
        %482 = vmatprep.subr.mxu0 0.0
        %483 = vmatpush1.xpose.msra.mxu0 0.0
        %484 = vmatprep.subr.mxu0 0.0
        %485 = vmatpush1.xpose.msra.mxu0 0.0
        %486 = vmatprep.subr.mxu0 0.0
        %487 = vmatpush1.xpose.msra.mxu0 0.0
        %488 = vmatprep.mubr.f32.mxu0 0.0
        %489 = vmatmul.mubr.f32.gmra.mrb[0].mxu0 %v419
        %v490 = vpop.f32.mrb[0].mxu0
        %v491 = vadd.f32 0.0, %v490
        %v492 = vpop.f32.mrb[0].mxu0
        %493 = vdwg.mxu0
        %v495 = vsel %vm341, %v331, 0
        %v498 = vsel %vm341, %v335, 0
        %500 = vmatprep.subr.mxu0 0.0
        %501 = vmatpush1.xpose.msra.mxu0 %v498
        %502 = vmatprep.subr.mxu0 0.0
        %503 = vmatpush1.xpose.msra.mxu0 0.0
        %504 = vmatprep.subr.mxu0 0.0
        %505 = vmatpush1.xpose.msra.mxu0 0.0
        %506 = vmatprep.subr.mxu0 0.0
        %507 = vmatpush1.xpose.msra.mxu0 0.0
        %508 = vmatprep.subr.mxu0 0.0
        %509 = vmatpush1.xpose.msra.mxu0 0.0
        %510 = vmatprep.subr.mxu0 0.0
        %511 = vmatpush1.xpose.msra.mxu0 0.0
        %512 = vmatprep.subr.mxu0 0.0
        %513 = vmatpush1.xpose.msra.mxu0 0.0
        %514 = vmatprep.subr.mxu0 0.0
        %515 = vmatpush1.xpose.msra.mxu0 0.0
        %516 = vmatprep.subr.mxu0 0.0
        %517 = vmatpush1.xpose.msra.mxu0 0.0
        %518 = vmatprep.subr.mxu0 0.0
        %519 = vmatpush1.xpose.msra.mxu0 0.0
        %520 = vmatprep.subr.mxu0 0.0
        %521 = vmatpush1.xpose.msra.mxu0 0.0
        %522 = vmatprep.subr.mxu0 0.0
        %523 = vmatpush1.xpose.msra.mxu0 0.0
        %524 = vmatprep.subr.mxu0 0.0
        %525 = vmatpush1.xpose.msra.mxu0 0.0
        %526 = vmatprep.subr.mxu0 0.0
        %527 = vmatpush1.xpose.msra.mxu0 0.0
        %528 = vmatprep.subr.mxu0 0.0
        %529 = vmatpush1.xpose.msra.mxu0 0.0
        %530 = vmatprep.subr.mxu0 0.0
        %531 = vmatpush1.xpose.msra.mxu0 0.0
        %532 = vmatprep.subr.mxu0 0.0
        %533 = vmatpush1.xpose.msra.mxu0 0.0
        %534 = vmatprep.subr.mxu0 0.0
        %535 = vmatpush1.xpose.msra.mxu0 0.0
        %536 = vmatprep.subr.mxu0 0.0
        %537 = vmatpush1.xpose.msra.mxu0 0.0
        %538 = vmatprep.subr.mxu0 0.0
        %539 = vmatpush1.xpose.msra.mxu0 0.0
        %540 = vmatprep.subr.mxu0 0.0
        %541 = vmatpush1.xpose.msra.mxu0 0.0
        %542 = vmatprep.subr.mxu0 0.0
        %543 = vmatpush1.xpose.msra.mxu0 0.0
        %544 = vmatprep.subr.mxu0 0.0
        %545 = vmatpush1.xpose.msra.mxu0 0.0
        %546 = vmatprep.subr.mxu0 0.0
        %547 = vmatpush1.xpose.msra.mxu0 0.0
        %548 = vmatprep.subr.mxu0 0.0
        %549 = vmatpush1.xpose.msra.mxu0 0.0
        %550 = vmatprep.subr.mxu0 0.0
        %551 = vmatpush1.xpose.msra.mxu0 0.0
        %552 = vmatprep.subr.mxu0 0.0
        %553 = vmatpush1.xpose.msra.mxu0 0.0
        %554 = vmatprep.subr.mxu0 0.0
        %555 = vmatpush1.xpose.msra.mxu0 0.0
        %556 = vmatprep.subr.mxu0 0.0
        %557 = vmatpush1.xpose.msra.mxu0 0.0
        %558 = vmatprep.subr.mxu0 0.0
        %559 = vmatpush1.xpose.msra.mxu0 0.0
        %560 = vmatprep.subr.mxu0 0.0
        %561 = vmatpush1.xpose.msra.mxu0 0.0
        %562 = vmatprep.subr.mxu0 0.0
        %563 = vmatpush1.xpose.msra.mxu0 0.0
        %564 = vmatprep.mubr.f32.mxu0 0.0
        %565 = vmatmul.mubr.f32.gmra.mrb[0].mxu0 %v495
        %v566 = vpop.f32.mrb[0].mxu0
        %v567 = vadd.f32 0.0, %v566
        %v568 = vpop.f32.mrb[0].mxu0
        %569 = vdwg.mxu0
        %v571 = vsel %vm341, %v332, 0
        %v574 = vsel %vm341, %v336, 0
        %576 = vmatprep.subr.mxu0 0.0
        %577 = vmatpush1.xpose.msra.mxu0 %v574
        %578 = vmatprep.subr.mxu0 0.0
        %579 = vmatpush1.xpose.msra.mxu0 0.0
        %580 = vmatprep.subr.mxu0 0.0
        %581 = vmatpush1.xpose.msra.mxu0 0.0
        %582 = vmatprep.subr.mxu0 0.0
        %583 = vmatpush1.xpose.msra.mxu0 0.0
        %584 = vmatprep.subr.mxu0 0.0
        %585 = vmatpush1.xpose.msra.mxu0 0.0
        %586 = vmatprep.subr.mxu0 0.0
        %587 = vmatpush1.xpose.msra.mxu0 0.0
        %588 = vmatprep.subr.mxu0 0.0
        %589 = vmatpush1.xpose.msra.mxu0 0.0
        %590 = vmatprep.subr.mxu0 0.0
        %591 = vmatpush1.xpose.msra.mxu0 0.0
        %592 = vmatprep.subr.mxu0 0.0
        %593 = vmatpush1.xpose.msra.mxu0 0.0
        %594 = vmatprep.subr.mxu0 0.0
        %595 = vmatpush1.xpose.msra.mxu0 0.0
        %596 = vmatprep.subr.mxu0 0.0
        %597 = vmatpush1.xpose.msra.mxu0 0.0
        %598 = vmatprep.subr.mxu0 0.0
        %599 = vmatpush1.xpose.msra.mxu0 0.0
        %600 = vmatprep.subr.mxu0 0.0
        %601 = vmatpush1.xpose.msra.mxu0 0.0
        %602 = vmatprep.subr.mxu0 0.0
        %603 = vmatpush1.xpose.msra.mxu0 0.0
        %604 = vmatprep.subr.mxu0 0.0
        %605 = vmatpush1.xpose.msra.mxu0 0.0
        %606 = vmatprep.subr.mxu0 0.0
        %607 = vmatpush1.xpose.msra.mxu0 0.0
        %608 = vmatprep.subr.mxu0 0.0
        %609 = vmatpush1.xpose.msra.mxu0 0.0
        %610 = vmatprep.subr.mxu0 0.0
        %611 = vmatpush1.xpose.msra.mxu0 0.0
        %612 = vmatprep.subr.mxu0 0.0
        %613 = vmatpush1.xpose.msra.mxu0 0.0
        %614 = vmatprep.subr.mxu0 0.0
        %615 = vmatpush1.xpose.msra.mxu0 0.0
        %616 = vmatprep.subr.mxu0 0.0
        %617 = vmatpush1.xpose.msra.mxu0 0.0
        %618 = vmatprep.subr.mxu0 0.0
        %619 = vmatpush1.xpose.msra.mxu0 0.0
        %620 = vmatprep.subr.mxu0 0.0
        %621 = vmatpush1.xpose.msra.mxu0 0.0
        %622 = vmatprep.subr.mxu0 0.0
        %623 = vmatpush1.xpose.msra.mxu0 0.0
        %624 = vmatprep.subr.mxu0 0.0
        %625 = vmatpush1.xpose.msra.mxu0 0.0
        %626 = vmatprep.subr.mxu0 0.0
        %627 = vmatpush1.xpose.msra.mxu0 0.0
        %628 = vmatprep.subr.mxu0 0.0
        %629 = vmatpush1.xpose.msra.mxu0 0.0
        %630 = vmatprep.subr.mxu0 0.0
        %631 = vmatpush1.xpose.msra.mxu0 0.0
        %632 = vmatprep.subr.mxu0 0.0
        %633 = vmatpush1.xpose.msra.mxu0 0.0
        %634 = vmatprep.subr.mxu0 0.0
        %635 = vmatpush1.xpose.msra.mxu0 0.0
        %636 = vmatprep.subr.mxu0 0.0
        %637 = vmatpush1.xpose.msra.mxu0 0.0
        %638 = vmatprep.subr.mxu0 0.0
        %639 = vmatpush1.xpose.msra.mxu0 0.0
        %640 = vmatprep.mubr.f32.mxu0 0.0
        %641 = vmatmul.mubr.f32.gmra.mrb[0].mxu0 %v571
        %v642 = vpop.f32.mrb[0].mxu0
        %v643 = vadd.f32 0.0, %v642
        %v644 = vpop.f32.mrb[0].mxu0
        %645 = vdwg.mxu0
        %v646 = vld [vmem:[#allocation3] sm:$0xff]
        %v647 = vld [vmem:[#allocation3 + $0x8] sm:$0xff]
        %v648 = vld [vmem:[#allocation3 + $0x10] sm:$0xff]
        %v649 = vld [vmem:[#allocation3 + $0x18] sm:$0xff]
        %v650 = vld [vmem:[#allocation4] sm:$0xff]
        %v651 = vld [vmem:[#allocation4 + $0x8] sm:$0xff]
        %v652 = vld [vmem:[#allocation4 + $0x10] sm:$0xff]
        %v653 = vld [vmem:[#allocation4 + $0x18] sm:$0xff]
        %vm654 = vcmask 64512
        %v655 = vsel %vm654, %v415, -inf
        %656 = vmax.xlane.f32.xlu0 %v655
        %v657 = vpop.xlane.xlu0 %656
        %v658 = vsel %vm654, %v491, -inf
        %659 = vmax.xlane.f32.xlu0 %v658
        %v660 = vpop.xlane.xlu0 %659
        %v661 = vsel %vm654, %v567, -inf
        %662 = vmax.xlane.f32.xlu0 %v661
        %v663 = vpop.xlane.xlu0 %662
        %v664 = vsel %vm654, %v643, -inf
        %665 = vmax.xlane.f32.xlu0 %v664
        %v666 = vpop.xlane.xlu0 %665
        %v667 = vmax.f32 %v646, %v657
        %v668 = vmax.f32 %v647, %v660
        %v669 = vmax.f32 %v648, %v663
        %v670 = vmax.f32 %v649, %v666
        %v671 = vsub.f32 %v646, %v667
        %v672 = vsub.f32 %v647, %v668
        %v673 = vsub.f32 %v648, %v669
        %v674 = vsub.f32 %v649, %v670
        %v675 = vmul.f32 %v671, 1.442695
        %v676 = vpow.pop %v675
        %v677 = vmul.f32 %v672, 1.442695
        %v678 = vpow.pop %v677
        %v679 = vmul.f32 %v673, 1.442695
        %v680 = vpow.pop %v679
        %v681 = vmul.f32 %v674, 1.442695
        %v682 = vpow.pop %v681
        %684 = vset.pattern.permute.xlu0 0
        %685 = vperm.xlu0 %684, %v667
        %v686 = vpop.permute.xlu0 %685
        %689 = vset.pattern.permute.xlu0 0
        %690 = vperm.xlu0 %689, %v668
        %v691 = vpop.permute.xlu0 %690
        %694 = vset.pattern.permute.xlu0 0
        %695 = vperm.xlu0 %694, %v669
        %v696 = vpop.permute.xlu0 %695
        %699 = vset.pattern.permute.xlu0 0
        %700 = vperm.xlu0 %699, %v670
        %v701 = vpop.permute.xlu0 %700
        %v703 = vsub.f32 %v415, %v686
        %v704 = vsub.f32 %v491, %v691
        %v705 = vsub.f32 %v567, %v696
        %v706 = vsub.f32 %v643, %v701
        %v707 = vmul.f32 %v703, 1.442695
        %v708 = vpow.pop %v707
        %v709 = vmul.f32 %v704, 1.442695
        %v710 = vpow.pop %v709
        %v711 = vmul.f32 %v705, 1.442695
        %v712 = vpow.pop %v711
        %v713 = vmul.f32 %v706, 1.442695
        %v714 = vpow.pop %v713
        %v715 = vmul.f32 %v676, %v650
        %v716 = vmul.f32 %v678, %v651
        %v717 = vmul.f32 %v680, %v652
        %v718 = vmul.f32 %v682, %v653
        %v719 = vsel %vm654, %v708, 0.0
        %720 = vadd.xlane.f32.xlu0 %v719
        %v721 = vpop.xlane.xlu0 %720
        %v722 = vsel %vm654, %v710, 0.0
        %723 = vadd.xlane.f32.xlu0 %v722
        %v724 = vpop.xlane.xlu0 %723
        %v725 = vsel %vm654, %v712, 0.0
        %726 = vadd.xlane.f32.xlu0 %v725
        %v727 = vpop.xlane.xlu0 %726
        %v728 = vsel %vm654, %v714, 0.0
        %729 = vadd.xlane.f32.xlu0 %v728
        %v730 = vpop.xlane.xlu0 %729
        %v731 = vadd.f32 %v715, %v721
        %v732 = vadd.f32 %v716, %v724
        %v733 = vadd.f32 %v717, %v727
        %v734 = vadd.f32 %v718, %v730
        %735 = vst [vmem:[#allocation4] sm:$0xff] %v731
        %736 = vst [vmem:[#allocation4 + $0x8] sm:$0xff] %v732
        %737 = vst [vmem:[#allocation4 + $0x10] sm:$0xff] %v733
        %738 = vst [vmem:[#allocation4 + $0x18] sm:$0xff] %v734
        %739 = vst [vmem:[#allocation3] sm:$0xff] %v667
        %740 = vst [vmem:[#allocation3 + $0x8] sm:$0xff] %v668
        %741 = vst [vmem:[#allocation3 + $0x10] sm:$0xff] %v669
        %742 = vst [vmem:[#allocation3 + $0x18] sm:$0xff] %v670
        %v744 = vsel %vm654, %v708, 0
        %746 = vmatprep.subr.mxu0 0.0
        %747 = vmatpush1.msra.mxu0 %v337
        %748 = vmatprep.subr.mxu0 0.0
        %749 = vmatpush1.msra.mxu0 0.0
        %750 = vmatprep.subr.mxu0 0.0
        %751 = vmatpush1.msra.mxu0 0.0
        %752 = vmatprep.subr.mxu0 0.0
        %753 = vmatpush1.msra.mxu0 0.0
        %754 = vmatprep.subr.mxu0 0.0
        %755 = vmatpush1.msra.mxu0 0.0
        %756 = vmatprep.subr.mxu0 0.0
        %757 = vmatpush1.msra.mxu0 0.0
        %758 = vmatprep.subr.mxu0 0.0
        %759 = vmatpush1.msra.mxu0 0.0
        %760 = vmatprep.subr.mxu0 0.0
        %761 = vmatpush1.msra.mxu0 0.0
        %762 = vmatprep.subr.mxu0 0.0
        %763 = vmatpush1.msra.mxu0 0.0
        %764 = vmatprep.subr.mxu0 0.0
        %765 = vmatpush1.msra.mxu0 0.0
        %766 = vmatprep.subr.mxu0 0.0
        %767 = vmatpush1.msra.mxu0 0.0
        %768 = vmatprep.subr.mxu0 0.0
        %769 = vmatpush1.msra.mxu0 0.0
        %770 = vmatprep.subr.mxu0 0.0
        %771 = vmatpush1.msra.mxu0 0.0
        %772 = vmatprep.subr.mxu0 0.0
        %773 = vmatpush1.msra.mxu0 0.0
        %774 = vmatprep.subr.mxu0 0.0
        %775 = vmatpush1.msra.mxu0 0.0
        %776 = vmatprep.subr.mxu0 0.0
        %777 = vmatpush1.msra.mxu0 0.0
        %778 = vmatprep.subr.mxu0 0.0
        %779 = vmatpush1.msra.mxu0 0.0
        %780 = vmatprep.subr.mxu0 0.0
        %781 = vmatpush1.msra.mxu0 0.0
        %782 = vmatprep.subr.mxu0 0.0
        %783 = vmatpush1.msra.mxu0 0.0
        %784 = vmatprep.subr.mxu0 0.0
        %785 = vmatpush1.msra.mxu0 0.0
        %786 = vmatprep.subr.mxu0 0.0
        %787 = vmatpush1.msra.mxu0 0.0
        %788 = vmatprep.subr.mxu0 0.0
        %789 = vmatpush1.msra.mxu0 0.0
        %790 = vmatprep.subr.mxu0 0.0
        %791 = vmatpush1.msra.mxu0 0.0
        %792 = vmatprep.subr.mxu0 0.0
        %793 = vmatpush1.msra.mxu0 0.0
        %794 = vmatprep.subr.mxu0 0.0
        %795 = vmatpush1.msra.mxu0 0.0
        %796 = vmatprep.subr.mxu0 0.0
        %797 = vmatpush1.msra.mxu0 0.0
        %798 = vmatprep.subr.mxu0 0.0
        %799 = vmatpush1.msra.mxu0 0.0
        %800 = vmatprep.subr.mxu0 0.0
        %801 = vmatpush1.msra.mxu0 0.0
        %802 = vmatprep.subr.mxu0 0.0
        %803 = vmatpush1.msra.mxu0 0.0
        %804 = vmatprep.subr.mxu0 0.0
        %805 = vmatpush1.msra.mxu0 0.0
        %806 = vmatprep.subr.mxu0 0.0
        %807 = vmatpush1.msra.mxu0 0.0
        %808 = vmatprep.subr.mxu0 0.0
        %809 = vmatpush1.msra.mxu0 0.0
        %810 = vmatprep.mubr.f32.mxu0 0.0
        %811 = vmatmul.mubr.f32.gmra.mrb[0].mxu0 %v744
        %v812 = vpop.f32.mrb[0].mxu0
        %v813 = vadd.f32 0.0, %v812
        %v814 = vpop.f32.mrb[0].mxu0
        %815 = vdwg.mxu0
        %v817 = vsel %vm654, %v710, 0
        %819 = vmatprep.subr.mxu0 0.0
        %820 = vmatpush1.msra.mxu0 %v338
        %821 = vmatprep.subr.mxu0 0.0
        %822 = vmatpush1.msra.mxu0 0.0
        %823 = vmatprep.subr.mxu0 0.0
        %824 = vmatpush1.msra.mxu0 0.0
        %825 = vmatprep.subr.mxu0 0.0
        %826 = vmatpush1.msra.mxu0 0.0
        %827 = vmatprep.subr.mxu0 0.0
        %828 = vmatpush1.msra.mxu0 0.0
        %829 = vmatprep.subr.mxu0 0.0
        %830 = vmatpush1.msra.mxu0 0.0
        %831 = vmatprep.subr.mxu0 0.0
        %832 = vmatpush1.msra.mxu0 0.0
        %833 = vmatprep.subr.mxu0 0.0
        %834 = vmatpush1.msra.mxu0 0.0
        %835 = vmatprep.subr.mxu0 0.0
        %836 = vmatpush1.msra.mxu0 0.0
        %837 = vmatprep.subr.mxu0 0.0
        %838 = vmatpush1.msra.mxu0 0.0
        %839 = vmatprep.subr.mxu0 0.0
        %840 = vmatpush1.msra.mxu0 0.0
        %841 = vmatprep.subr.mxu0 0.0
        %842 = vmatpush1.msra.mxu0 0.0
        %843 = vmatprep.subr.mxu0 0.0
        %844 = vmatpush1.msra.mxu0 0.0
        %845 = vmatprep.subr.mxu0 0.0
        %846 = vmatpush1.msra.mxu0 0.0
        %847 = vmatprep.subr.mxu0 0.0
        %848 = vmatpush1.msra.mxu0 0.0
        %849 = vmatprep.subr.mxu0 0.0
        %850 = vmatpush1.msra.mxu0 0.0
        %851 = vmatprep.subr.mxu0 0.0
        %852 = vmatpush1.msra.mxu0 0.0
        %853 = vmatprep.subr.mxu0 0.0
        %854 = vmatpush1.msra.mxu0 0.0
        %855 = vmatprep.subr.mxu0 0.0
        %856 = vmatpush1.msra.mxu0 0.0
        %857 = vmatprep.subr.mxu0 0.0
        %858 = vmatpush1.msra.mxu0 0.0
        %859 = vmatprep.subr.mxu0 0.0
        %860 = vmatpush1.msra.mxu0 0.0
        %861 = vmatprep.subr.mxu0 0.0
        %862 = vmatpush1.msra.mxu0 0.0
        %863 = vmatprep.subr.mxu0 0.0
        %864 = vmatpush1.msra.mxu0 0.0
        %865 = vmatprep.subr.mxu0 0.0
        %866 = vmatpush1.msra.mxu0 0.0
        %867 = vmatprep.subr.mxu0 0.0
        %868 = vmatpush1.msra.mxu0 0.0
        %869 = vmatprep.subr.mxu0 0.0
        %870 = vmatpush1.msra.mxu0 0.0
        %871 = vmatprep.subr.mxu0 0.0
        %872 = vmatpush1.msra.mxu0 0.0
        %873 = vmatprep.subr.mxu0 0.0
        %874 = vmatpush1.msra.mxu0 0.0
        %875 = vmatprep.subr.mxu0 0.0
        %876 = vmatpush1.msra.mxu0 0.0
        %877 = vmatprep.subr.mxu0 0.0
        %878 = vmatpush1.msra.mxu0 0.0
        %879 = vmatprep.subr.mxu0 0.0
        %880 = vmatpush1.msra.mxu0 0.0
        %881 = vmatprep.subr.mxu0 0.0
        %882 = vmatpush1.msra.mxu0 0.0
        %883 = vmatprep.mubr.f32.mxu0 0.0
        %884 = vmatmul.mubr.f32.gmra.mrb[0].mxu0 %v817
        %v885 = vpop.f32.mrb[0].mxu0
        %v886 = vadd.f32 0.0, %v885
        %v887 = vpop.f32.mrb[0].mxu0
        %888 = vdwg.mxu0
        %v890 = vsel %vm654, %v712, 0
        %892 = vmatprep.subr.mxu0 0.0
        %893 = vmatpush1.msra.mxu0 %v339
        %894 = vmatprep.subr.mxu0 0.0
        %895 = vmatpush1.msra.mxu0 0.0
        %896 = vmatprep.subr.mxu0 0.0
        %897 = vmatpush1.msra.mxu0 0.0
        %898 = vmatprep.subr.mxu0 0.0
        %899 = vmatpush1.msra.mxu0 0.0
        %900 = vmatprep.subr.mxu0 0.0
        %901 = vmatpush1.msra.mxu0 0.0
        %902 = vmatprep.subr.mxu0 0.0
        %903 = vmatpush1.msra.mxu0 0.0
        %904 = vmatprep.subr.mxu0 0.0
        %905 = vmatpush1.msra.mxu0 0.0
        %906 = vmatprep.subr.mxu0 0.0
        %907 = vmatpush1.msra.mxu0 0.0
        %908 = vmatprep.subr.mxu0 0.0
        %909 = vmatpush1.msra.mxu0 0.0
        %910 = vmatprep.subr.mxu0 0.0
        %911 = vmatpush1.msra.mxu0 0.0
        %912 = vmatprep.subr.mxu0 0.0
        %913 = vmatpush1.msra.mxu0 0.0
        %914 = vmatprep.subr.mxu0 0.0
        %915 = vmatpush1.msra.mxu0 0.0
        %916 = vmatprep.subr.mxu0 0.0
        %917 = vmatpush1.msra.mxu0 0.0
        %918 = vmatprep.subr.mxu0 0.0
        %919 = vmatpush1.msra.mxu0 0.0
        %920 = vmatprep.subr.mxu0 0.0
        %921 = vmatpush1.msra.mxu0 0.0
        %922 = vmatprep.subr.mxu0 0.0
        %923 = vmatpush1.msra.mxu0 0.0
        %924 = vmatprep.subr.mxu0 0.0
        %925 = vmatpush1.msra.mxu0 0.0
        %926 = vmatprep.subr.mxu0 0.0
        %927 = vmatpush1.msra.mxu0 0.0
        %928 = vmatprep.subr.mxu0 0.0
        %929 = vmatpush1.msra.mxu0 0.0
        %930 = vmatprep.subr.mxu0 0.0
        %931 = vmatpush1.msra.mxu0 0.0
        %932 = vmatprep.subr.mxu0 0.0
        %933 = vmatpush1.msra.mxu0 0.0
        %934 = vmatprep.subr.mxu0 0.0
        %935 = vmatpush1.msra.mxu0 0.0
        %936 = vmatprep.subr.mxu0 0.0
        %937 = vmatpush1.msra.mxu0 0.0
        %938 = vmatprep.subr.mxu0 0.0
        %939 = vmatpush1.msra.mxu0 0.0
        %940 = vmatprep.subr.mxu0 0.0
        %941 = vmatpush1.msra.mxu0 0.0
        %942 = vmatprep.subr.mxu0 0.0
        %943 = vmatpush1.msra.mxu0 0.0
        %944 = vmatprep.subr.mxu0 0.0
        %945 = vmatpush1.msra.mxu0 0.0
        %946 = vmatprep.subr.mxu0 0.0
        %947 = vmatpush1.msra.mxu0 0.0
        %948 = vmatprep.subr.mxu0 0.0
        %949 = vmatpush1.msra.mxu0 0.0
        %950 = vmatprep.subr.mxu0 0.0
        %951 = vmatpush1.msra.mxu0 0.0
        %952 = vmatprep.subr.mxu0 0.0
        %953 = vmatpush1.msra.mxu0 0.0
        %954 = vmatprep.subr.mxu0 0.0
        %955 = vmatpush1.msra.mxu0 0.0
        %956 = vmatprep.mubr.f32.mxu0 0.0
        %957 = vmatmul.mubr.f32.gmra.mrb[0].mxu0 %v890
        %v958 = vpop.f32.mrb[0].mxu0
        %v959 = vadd.f32 0.0, %v958
        %v960 = vpop.f32.mrb[0].mxu0
        %961 = vdwg.mxu0
        %v963 = vsel %vm654, %v714, 0
        %965 = vmatprep.subr.mxu0 0.0
        %966 = vmatpush1.msra.mxu0 %v340
        %967 = vmatprep.subr.mxu0 0.0
        %968 = vmatpush1.msra.mxu0 0.0
        %969 = vmatprep.subr.mxu0 0.0
        %970 = vmatpush1.msra.mxu0 0.0
        %971 = vmatprep.subr.mxu0 0.0
        %972 = vmatpush1.msra.mxu0 0.0
        %973 = vmatprep.subr.mxu0 0.0
        %974 = vmatpush1.msra.mxu0 0.0
        %975 = vmatprep.subr.mxu0 0.0
        %976 = vmatpush1.msra.mxu0 0.0
        %977 = vmatprep.subr.mxu0 0.0
        %978 = vmatpush1.msra.mxu0 0.0
        %979 = vmatprep.subr.mxu0 0.0
        %980 = vmatpush1.msra.mxu0 0.0
        %981 = vmatprep.subr.mxu0 0.0
        %982 = vmatpush1.msra.mxu0 0.0
        %983 = vmatprep.subr.mxu0 0.0
        %984 = vmatpush1.msra.mxu0 0.0
        %985 = vmatprep.subr.mxu0 0.0
        %986 = vmatpush1.msra.mxu0 0.0
        %987 = vmatprep.subr.mxu0 0.0
        %988 = vmatpush1.msra.mxu0 0.0
        %989 = vmatprep.subr.mxu0 0.0
        %990 = vmatpush1.msra.mxu0 0.0
        %991 = vmatprep.subr.mxu0 0.0
        %992 = vmatpush1.msra.mxu0 0.0
        %993 = vmatprep.subr.mxu0 0.0
        %994 = vmatpush1.msra.mxu0 0.0
        %995 = vmatprep.subr.mxu0 0.0
        %996 = vmatpush1.msra.mxu0 0.0
        %997 = vmatprep.subr.mxu0 0.0
        %998 = vmatpush1.msra.mxu0 0.0
        %999 = vmatprep.subr.mxu0 0.0
        %1000 = vmatpush1.msra.mxu0 0.0
        %1001 = vmatprep.subr.mxu0 0.0
        %1002 = vmatpush1.msra.mxu0 0.0
        %1003 = vmatprep.subr.mxu0 0.0
        %1004 = vmatpush1.msra.mxu0 0.0
        %1005 = vmatprep.subr.mxu0 0.0
        %1006 = vmatpush1.msra.mxu0 0.0
        %1007 = vmatprep.subr.mxu0 0.0
        %1008 = vmatpush1.msra.mxu0 0.0
        %1009 = vmatprep.subr.mxu0 0.0
        %1010 = vmatpush1.msra.mxu0 0.0
        %1011 = vmatprep.subr.mxu0 0.0
        %1012 = vmatpush1.msra.mxu0 0.0
        %1013 = vmatprep.subr.mxu0 0.0
        %1014 = vmatpush1.msra.mxu0 0.0
        %1015 = vmatprep.subr.mxu0 0.0
        %1016 = vmatpush1.msra.mxu0 0.0
        %1017 = vmatprep.subr.mxu0 0.0
        %1018 = vmatpush1.msra.mxu0 0.0
        %1019 = vmatprep.subr.mxu0 0.0
        %1020 = vmatpush1.msra.mxu0 0.0
        %1021 = vmatprep.subr.mxu0 0.0
        %1022 = vmatpush1.msra.mxu0 0.0
        %1023 = vmatprep.subr.mxu0 0.0
        %1024 = vmatpush1.msra.mxu0 0.0
        %1025 = vmatprep.subr.mxu0 0.0
        %1026 = vmatpush1.msra.mxu0 0.0
        %1027 = vmatprep.subr.mxu0 0.0
        %1028 = vmatpush1.msra.mxu0 0.0
        %1029 = vmatprep.mubr.f32.mxu0 0.0
        %1030 = vmatmul.mubr.f32.gmra.mrb[0].mxu0 %v963
        %v1031 = vpop.f32.mrb[0].mxu0
        %v1032 = vadd.f32 0.0, %v1031
        %v1033 = vpop.f32.mrb[0].mxu0
        %1034 = vdwg.mxu0
        %v1035 = vld [vmem:[#allocation5] sm:$0xff]
        %v1036 = vld [vmem:[#allocation5 + $0x8] sm:$0xff]
        %v1037 = vld [vmem:[#allocation5 + $0x10] sm:$0xff]
        %v1038 = vld [vmem:[#allocation5 + $0x18] sm:$0xff]
        %1040 = vset.pattern.permute.xlu0 0
        %1041 = vperm.xlu0 %1040, %v676
        %v1042 = vpop.permute.xlu0 %1041
        %1045 = vset.pattern.permute.xlu0 0
        %1046 = vperm.xlu0 %1045, %v678
        %v1047 = vpop.permute.xlu0 %1046
        %1050 = vset.pattern.permute.xlu0 0
        %1051 = vperm.xlu0 %1050, %v680
        %v1052 = vpop.permute.xlu0 %1051
        %1055 = vset.pattern.permute.xlu0 0
        %1056 = vperm.xlu0 %1055, %v682
        %v1057 = vpop.permute.xlu0 %1056
        %v1059 = vmul.f32 %v1042, %v1035
        %v1060 = vmul.f32 %v1047, %v1036
        %v1061 = vmul.f32 %v1052, %v1037
        %v1062 = vmul.f32 %v1057, %v1038
        %v1063 = vadd.f32 %v1059, %v813
        %v1064 = vadd.f32 %v1060, %v886
        %v1065 = vadd.f32 %v1061, %v959
        %v1066 = vadd.f32 %v1062, %v1032
        %1067 = vst.msk [vmem:[#allocation5] sm:$0xff] %vm341, %v1063
        %1068 = vst.msk [vmem:[#allocation5 + $0x8] sm:$0xff] %vm341, %v1064
        %1069 = vst.msk [vmem:[#allocation5 + $0x10] sm:$0xff] %vm341, %v1065
        %1070 = vst.msk [vmem:[#allocation5 + $0x18] sm:$0xff] %vm341, %v1066
        // Predicated region
        $region49: #{tpu_custom_call.1} parent=31 // pred_check
          %p1071 = pneg %p300
        $region50: #{tpu_custom_call.1} parent=31 // pred_check_branch
          %1073 = sbr.rel (%p1071) target = $region52
        $region51: #{tpu_custom_call.1} parent=31 // pred_region
          %v1074 = vld [vmem:[#allocation4] sm:$0xff]
          %v1075 = vld [vmem:[#allocation4 + $0x8] sm:$0xff]
          %v1076 = vld [vmem:[#allocation4 + $0x10] sm:$0xff]
          %v1077 = vld [vmem:[#allocation4 + $0x18] sm:$0xff]
          %v1078 = vrcp.pop %v1074
          %v1079 = vrcp.pop %v1075
          %v1080 = vrcp.pop %v1076
          %v1081 = vrcp.pop %v1077
          %v1082 = vld [vmem:[#allocation5] sm:$0xff]
          %v1083 = vld [vmem:[#allocation5 + $0x8] sm:$0xff]
          %v1084 = vld [vmem:[#allocation5 + $0x10] sm:$0xff]
          %v1085 = vld [vmem:[#allocation5 + $0x18] sm:$0xff]
          %1087 = vset.pattern.permute.xlu0 0
          %1088 = vperm.xlu0 %1087, %v1078
          %v1089 = vpop.permute.xlu0 %1088
          %1092 = vset.pattern.permute.xlu0 0
          %1093 = vperm.xlu0 %1092, %v1079
          %v1094 = vpop.permute.xlu0 %1093
          %1097 = vset.pattern.permute.xlu0 0
          %1098 = vperm.xlu0 %1097, %v1080
          %v1099 = vpop.permute.xlu0 %1098
          %1102 = vset.pattern.permute.xlu0 0
          %1103 = vperm.xlu0 %1102, %v1081
          %v1104 = vpop.permute.xlu0 %1103
          %v1106 = vmul.f32 %v1082, %v1089
          %v1107 = vmul.f32 %v1083, %v1094
          %v1108 = vmul.f32 %v1084, %v1099
          %v1109 = vmul.f32 %v1085, %v1104
          %1110 = vst.msk [vmem:[%s295] sm:$0xff] %vm341, %v1106
          %1111 = vst.msk [vmem:[%s295 + $0x8] sm:$0xff] %vm341, %v1107
          %1112 = vst.msk [vmem:[%s295 + $0x10] sm:$0xff] %vm341, %v1108
          %1113 = vst.msk [vmem:[%s295 + $0x18] sm:$0xff] %vm341, %v1109
        $region52: #{tpu_custom_call.1} parent=31 // pred_fallthru
          _
        %s1114 = sand.u32 %s136, 1
        %s1115 = scalar_lea.sflag [#allocation8], %s1114
        %s1116 = sand.u32 %s136, 1
        %s1117 = smul.addr %s1116, 32
        %s1118 = scalar_lea.vmem [#allocation12], %s1117
        // Predicated region
        $region53: #{tpu_custom_call.1} parent=31 // pred_check
          %p1119 = pneg %p146
        $region54: #{tpu_custom_call.1} parent=31 // pred_check_branch
          %1121 = sbr.rel (%p1119) target = $region56
        $region55: #{tpu_custom_call.1} parent=31 // pred_region
          %s1122 = smul.u32 4, %s28
          %s1124 = ssub.s32 512, 512
          %1125 = vsyncadd %s1115, %s1124
          %s1126 = sadd.s32 %s29, %s1122
          %s1127 = smul.addr %s1126, 128
          %s1128 = scalar_lea.hbm %s3, %s1127
          %s1129 = sshll.u32 %s1118, 4
          %s1130 = int_to_ptr.vmem [resolvable:$true] %s1129
          %1135 = dma.vmem_to_hbm [thread:$0]  %s1130, 512, %s1128, %s1115, 128, 128, 8
        $region56: #{tpu_custom_call.1} parent=31 // pred_fallthru
          _
      $region32: #{tpu_custom_call.1} parent=5 // pred_fallthru
        _
      %p1136 = scmp.le.s32.totalorder 2, %s18
      // Predicated region
      $region57: #{tpu_custom_call.1} parent=5 // pred_check
        %p1137 = pneg %p1136
      $region58: #{tpu_custom_call.1} parent=5 // pred_check_branch
        %1139 = sbr.rel (%p1137) target = $region60
      $region59: #{tpu_custom_call.1} parent=5 // pred_region
        %s1140 = ssub.s32 %s18, 2
        // Predicated region
        $region61: #{tpu_custom_call.1} parent=59 // pred_check
          %p1141 = pneg %p152
        $region62: #{tpu_custom_call.1} parent=59 // pred_check_branch
          %1143 = sbr.rel (%p1141) target = $region64
        $region63: #{tpu_custom_call.1} parent=59 // pred_region
          %s1144 = sand.u32 %s137, 1
          %s1145 = scalar_lea.sflag [#allocation8], %s1144
          %s1146 = sand.u32 %s137, 1
          %s1147 = smul.addr %s1146, 32
          %s1148 = scalar_lea.vmem [#allocation12], %s1147
          %1149 = dma.done %s1145, 512
        $region64: #{tpu_custom_call.1} parent=59 // pred_fallthru
          _
      $region60: #{tpu_custom_call.1} parent=5 // pred_fallthru
        _
    $region6: #{tpu_custom_call.1} parent=1 // loop_footer
      %s22 = sadd.s32 1, %s18
    $region7: #{tpu_custom_call.1} parent=1 // loop_footer_branch
      %17 = sbr.rel target = $region3
    $region8: #{tpu_custom_call.1} parent=1 // loop_exit
      _
    %1150 = vsyncpa [#allocation7], 1
    %s1151 = scalar_lea.sflag [#allocation7], 1
    %1152 = vsyncpa %s1151, 1
    %1153 = vsyncpa [#allocation10], 1
    %s1154 = scalar_lea.sflag [#allocation10], 1
    %1155 = vsyncpa %s1154, 1
    %1156 = vsyncpa [#allocation8], 1
    %s1157 = scalar_lea.sflag [#allocation8], 1
    %1158 = vsyncpa %s1157, 1

</llo_original>
